<compile_context>
chip_gen: v5e
topology: v5e:2x2
jax: 0.10.0
libtpu: 0.0.40
codegen_flags: <defaults>
</compile_context>

<pallas_src>
import functools

import jax
import jax.numpy as jnp
from jax import lax
from jax.experimental import pallas as pl
from jax.experimental.pallas import tpu as pltpu

OUT_CHANNELS = 512
EPS = 1e-8
VMEM_LIMIT_BYTES = 48 * 1024 * 1024   # <= v7x 64 MiB physical, > v5e 16 MiB default
VMEM_BLOCK_BUDGET = 32 * 1024 * 1024  # accounted blocks+temps; 16 MiB headroom


def _boundary_diff_kernel(x_ref, c_ref, o_ref, *, W):
    xb = x_ref[...].astype(jnp.float32)               # (tn, 2*W), upcast in VMEM
    x1 = xb[:, :W]                                    # boundary row 1
    x2 = xb[:, W:]                                    # boundary row 2

    # W-axis reductions (XLU slot) -- hidden under the (tn, 512) VPU math.
    s1 = jnp.sum(x1, axis=-1, keepdims=True)          # (tn, 1)
    s2 = jnp.sum(x2, axis=-1, keepdims=True)
    s11 = jnp.sum(x1 * x1, axis=-1, keepdims=True)
    s22 = jnp.sum(x2 * x2, axis=-1, keepdims=True)
    s12 = jnp.sum(x1 * x2, axis=-1, keepdims=True)

    cst = c_ref[...]                                  # (8, 512) packed constants
    w2 = cst[0:1, :]                                  # w * w
    wb = cst[1:2, :]                                  # w * b
    cc = cst[2:3, :]                                  # W * b * b

    t1 = s1 * wb                                      # (tn, 512)
    t2 = s2 * wb
    g1 = t1 + cc                                      # shared adds (no f32 FMA
    g2 = t2 + cc                                      #  on v5e/v6e VPU)

    dot = s12 * w2 + (t2 + g1)                        # <a, b>
    # ||a||^2, ||b||^2; clamp each (matches torch per-norm eps clamp and guards
    # against slightly-negative values from roundoff in the moment expansion).
    sq1 = jnp.maximum(s11 * w2 + (t1 + g1), EPS * EPS)
    sq2 = jnp.maximum(s22 * w2 + (t2 + g2), EPS * EPS)

    # sqrt(max(sq1,e^2)) * sqrt(max(sq2,e^2)) -> single EUP rsqrt, no VALU div.
    o_ref[...] = (dot * lax.rsqrt(sq1 * sq2)).astype(o_ref.dtype)


def _round_up(v, m):
    return ((v + m - 1) // m) * m


def _choose_tn(N, W, in_itemsize, out_itemsize):
    """Row tile sized from a VMEM budget (double-buffered in/out blocks plus
    ~6 live (tn,512) f32 temporaries), capped at 2048 rows.  When N allows,
    shrink so the grid has an even number of steps >= 4 (2+ balanced steps per
    TensorCore on v7x, keeps the DMA pipeline overlapped)."""
    per_row = (2 * (2 * W) * in_itemsize            # double-buffered input
               + 2 * OUT_CHANNELS * out_itemsize    # double-buffered output
               + 6 * OUT_CHANNELS * 4)              # live f32 intermediates
    cap = max(8, (VMEM_BLOCK_BUDGET // per_row) // 8 * 8)
    t_cap = min(2048, cap)

    nb = pl.cdiv(N, t_cap)
    if N >= 32:
        nb = max(nb, 4)
        if nb % 2:
            nb += 1
    t = max(8, _round_up(pl.cdiv(N, nb), 8))
    return min(t, t_cap, _round_up(N, 8))


def boundary_difference(x, conv_weight, conv_bias, *, tn=None,
                        out_dtype=jnp.float32):
    """x: (B, C, 2, W). Returns (B*C, 512) in out_dtype (default float32)."""
    B, C, H, W = x.shape
    assert H == 2, "BoundaryDifference expects H == 2 (split into two rows)"
    N = B * C

    # Contiguous reshape; keep bf16/f32 as-is (upcast happens per-block in VMEM).
    in_dtype = x.dtype if x.dtype in (jnp.bfloat16, jnp.float32) else jnp.float32
    xf = x.reshape(N, 2 * W).astype(in_dtype)
    in_itemsize = jnp.dtype(in_dtype).itemsize
    out_itemsize = jnp.dtype(out_dtype).itemsize

    if tn is None:
        tn = _choose_tn(N, W, in_itemsize, out_itemsize)
    n_blocks = pl.cdiv(N, tn)
    Np = n_blocks * tn
    if Np != N:  # pad ragged tail so tn can be chosen purely for performance
        xf = jnp.pad(xf, ((0, Np - N), (0, 0)))

    # Per-channel constants computed once, packed into a single (8, 512) slab.
    w = conv_weight.reshape(1, OUT_CHANNELS).astype(jnp.float32)
    b = conv_bias.reshape(1, OUT_CHANNELS).astype(jnp.float32)
    consts = jnp.concatenate(
        [w * w, w * b, jnp.float32(W) * b * b,
         jnp.zeros((5, OUT_CHANNELS), jnp.float32)], axis=0)   # (8, 512)

    cost = pl.CostEstimate(
        flops=int(N) * (8 * W + 22 * OUT_CHANNELS),
        transcendentals=int(N) * OUT_CHANNELS,
        bytes_accessed=int(N) * (2 * W * in_itemsize
                                 + OUT_CHANNELS * out_itemsize)
        + 8 * OUT_CHANNELS * 4,
    )

    out = pl.pallas_call(
        functools.partial(_boundary_diff_kernel, W=W),
        out_shape=jax.ShapeDtypeStruct((Np, OUT_CHANNELS), out_dtype),
        grid_spec=pltpu.PrefetchScalarGridSpec(
            num_scalar_prefetch=0,
            grid=(n_blocks,),
            in_specs=[
                pl.BlockSpec((tn, 2 * W), lambda i: (i, 0)),
                pl.BlockSpec((8, OUT_CHANNELS), lambda i: (0, 0)),
            ],
            out_specs=pl.BlockSpec((tn, OUT_CHANNELS), lambda i: (i, 0)),
        ),
        compiler_params=pltpu.CompilerParams(
            dimension_semantics=("parallel",),
            vmem_limit_bytes=VMEM_LIMIT_BYTES),
        cost_estimate=cost,
    )(xf, consts)

    return out[:N] if Np != N else out


def _reference(x, conv_weight, conv_bias):
    """Pure-JAX reference mirroring the PyTorch forward."""
    B, C, H, W = x.shape
    N = B * C
    xv = x.reshape(N, 1, H, W).astype(jnp.float32)
    bd_1 = xv[:, 0, 0, :]                             # (N, W)
    bd_2 = xv[:, 0, 1, :]
    wk = conv_weight.reshape(OUT_CHANNELS, 1).astype(jnp.float32)
    b = conv_bias.reshape(1, OUT_CHANNELS, 1).astype(jnp.float32)
    a1 = bd_1[:, None, :] * wk[None, :, :] + b        # (N, 512, W)
    a2 = bd_2[:, None, :] * wk[None, :, :] + b
    num = jnp.sum(a1 * a2, axis=2)
    den = (jnp.maximum(jnp.linalg.norm(a1, axis=2), EPS)
           * jnp.maximum(jnp.linalg.norm(a2, axis=2), EPS))
    return num / den


if __name__ == "__main__":
    key = jax.random.PRNGKey(0)
    kx, kw, kb = jax.random.split(key, 3)

    B, C, H, W = 2, 4, 2, 16
    x = jax.random.normal(kx, (B, C, H, W), dtype=jnp.float32)

    # Deterministic synthetic Conv2d(1, 512, kernel_size=(1,1)) parameters.
    conv_weight = jax.random.normal(kw, (OUT_CHANNELS, 1, 1, 1),
                                    dtype=jnp.float32) * 0.1
    conv_bias = jax.random.normal(kb, (OUT_CHANNELS,), dtype=jnp.float32) * 0.1

    out = boundary_difference(x, conv_weight, conv_bias)
    out = jax.block_until_ready(out)

    ref = _reference(x, conv_weight, conv_bias)
    assert out.shape == (B * C, OUT_CHANNELS)
    assert jnp.allclose(out, ref, rtol=1e-4, atol=1e-5), (
        float(jnp.max(jnp.abs(out - ref))))

    print("KERNEL_OK")
</pallas_src>

<mosaic_0001>
module attributes {stable_mosaic.version = 11 : i64} {
  func.func @_boundary_diff_kernel(%arg0: i32, %arg1: memref<8x32xf32, #tpu.memory_space<vmem>>, %arg2: memref<8x512xf32, #tpu.memory_space<vmem>>, %arg3: memref<8x512xf32, #tpu.memory_space<vmem>>) attributes {dimension_semantics = [#tpu.dimension_semantics<parallel>], iteration_bounds = array<i64: 1>, scalar_prefetch = 0 : i64, scratch_operands = 0 : i64, tpu.core_type = #tpu.core_type<tc>, window_params = [{transform_indices = @transform_0, window_bounds = array<i64: 8, 32>}, {pipeline_mode = #tpu.pipeline_mode<synchronous>, transform_indices = @transform_1, window_bounds = array<i64: 8, 512>}, {transform_indices = @transform_2, window_bounds = array<i64: 8, 512>}]} {
    %c0 = arith.constant 0 : index
    %c0_0 = arith.constant 0 : index
    %0 = vector.load %arg1[%c0, %c0_0] : memref<8x32xf32, #tpu.memory_space<vmem>>, vector<8x32xf32>
    %1 = vector.extract_strided_slice %0 {offsets = [0, 0], sizes = [8, 16], strides = [1, 1]} : vector<8x32xf32> to vector<8x16xf32>
    %2 = vector.extract_strided_slice %0 {offsets = [0, 16], sizes = [8, 16], strides = [1, 1]} : vector<8x32xf32> to vector<8x16xf32>
    %cst = arith.constant dense<0.000000e+00> : vector<8xf32>
    %3 = vector.multi_reduction <add>, %1, %cst [1] : vector<8x16xf32> to vector<8xf32>
    %4 = vector.shape_cast %3 : vector<8xf32> to vector<8x1xf32>
    %cst_1 = arith.constant dense<0.000000e+00> : vector<8xf32>
    %5 = vector.multi_reduction <add>, %2, %cst_1 [1] : vector<8x16xf32> to vector<8xf32>
    %6 = vector.shape_cast %5 : vector<8xf32> to vector<8x1xf32>
    %7 = arith.mulf %1, %1 : vector<8x16xf32>
    %cst_2 = arith.constant dense<0.000000e+00> : vector<8xf32>
    %8 = vector.multi_reduction <add>, %7, %cst_2 [1] : vector<8x16xf32> to vector<8xf32>
    %9 = vector.shape_cast %8 : vector<8xf32> to vector<8x1xf32>
    %10 = arith.mulf %2, %2 : vector<8x16xf32>
    %cst_3 = arith.constant dense<0.000000e+00> : vector<8xf32>
    %11 = vector.multi_reduction <add>, %10, %cst_3 [1] : vector<8x16xf32> to vector<8xf32>
    %12 = vector.shape_cast %11 : vector<8xf32> to vector<8x1xf32>
    %13 = arith.mulf %1, %2 : vector<8x16xf32>
    %cst_4 = arith.constant dense<0.000000e+00> : vector<8xf32>
    %14 = vector.multi_reduction <add>, %13, %cst_4 [1] : vector<8x16xf32> to vector<8xf32>
    %15 = vector.shape_cast %14 : vector<8xf32> to vector<8x1xf32>
    %c0_5 = arith.constant 0 : index
    %c0_6 = arith.constant 0 : index
    %16 = vector.load %arg2[%c0_5, %c0_6] : memref<8x512xf32, #tpu.memory_space<vmem>>, vector<8x512xf32>
    %17 = vector.extract_strided_slice %16 {offsets = [0, 0], sizes = [1, 512], strides = [1, 1]} : vector<8x512xf32> to vector<1x512xf32>
    %18 = vector.extract_strided_slice %16 {offsets = [1, 0], sizes = [1, 512], strides = [1, 1]} : vector<8x512xf32> to vector<1x512xf32>
    %19 = vector.extract_strided_slice %16 {offsets = [2, 0], sizes = [1, 512], strides = [1, 1]} : vector<8x512xf32> to vector<1x512xf32>
    %20 = vector.broadcast %4 : vector<8x1xf32> to vector<8x512xf32>
    %21 = vector.broadcast %18 : vector<1x512xf32> to vector<8x512xf32>
    %22 = arith.mulf %20, %21 : vector<8x512xf32>
    %23 = vector.broadcast %6 : vector<8x1xf32> to vector<8x512xf32>
    %24 = vector.broadcast %18 : vector<1x512xf32> to vector<8x512xf32>
    %25 = arith.mulf %23, %24 : vector<8x512xf32>
    %26 = vector.broadcast %19 : vector<1x512xf32> to vector<8x512xf32>
    %27 = arith.addf %22, %26 : vector<8x512xf32>
    %28 = vector.broadcast %19 : vector<1x512xf32> to vector<8x512xf32>
    %29 = arith.addf %25, %28 : vector<8x512xf32>
    %30 = vector.broadcast %15 : vector<8x1xf32> to vector<8x512xf32>
    %31 = vector.broadcast %17 : vector<1x512xf32> to vector<8x512xf32>
    %32 = arith.mulf %30, %31 : vector<8x512xf32>
    %33 = arith.addf %25, %27 : vector<8x512xf32>
    %34 = arith.addf %32, %33 : vector<8x512xf32>
    %35 = vector.broadcast %9 : vector<8x1xf32> to vector<8x512xf32>
    %36 = vector.broadcast %17 : vector<1x512xf32> to vector<8x512xf32>
    %37 = arith.mulf %35, %36 : vector<8x512xf32>
    %38 = arith.addf %22, %27 : vector<8x512xf32>
    %39 = arith.addf %37, %38 : vector<8x512xf32>
    %cst_7 = arith.constant 1.000000e-16 : f32
    %40 = vector.broadcast %cst_7 : f32 to vector<8x512xf32>
    %41 = arith.maximumf %39, %40 : vector<8x512xf32>
    %42 = vector.broadcast %12 : vector<8x1xf32> to vector<8x512xf32>
    %43 = vector.broadcast %17 : vector<1x512xf32> to vector<8x512xf32>
    %44 = arith.mulf %42, %43 : vector<8x512xf32>
    %45 = arith.addf %25, %29 : vector<8x512xf32>
    %46 = arith.addf %44, %45 : vector<8x512xf32>
    %cst_8 = arith.constant 1.000000e-16 : f32
    %47 = vector.broadcast %cst_8 : f32 to vector<8x512xf32>
    %48 = arith.maximumf %46, %47 : vector<8x512xf32>
    %49 = arith.mulf %41, %48 : vector<8x512xf32>
    %50 = math.rsqrt %49 : vector<8x512xf32>
    %51 = arith.mulf %34, %50 : vector<8x512xf32>
    %c0_9 = arith.constant 0 : index
    %c0_10 = arith.constant 0 : index
    %52 = vector.load %arg3[%c0_9, %c0_10] : memref<8x512xf32, #tpu.memory_space<vmem>>, vector<8x512xf32>
    tpu.vector_store %arg3[%c0_9, %c0_10], %51 {strides = array<i32>} : memref<8x512xf32, #tpu.memory_space<vmem>>, vector<8x512xf32>,
    return
  }
  func.func @transform_0(%arg0: i32) -> (i32, i32) {
    %c0_i32 = arith.constant 0 : i32
    %c0_i32_0 = arith.constant 0 : i32
    return %arg0, %c0_i32 : i32, i32
  }
  func.func @transform_1(%arg0: i32) -> (i32, i32) {
    %c0_i32 = arith.constant 0 : i32
    %c0_i32_0 = arith.constant 0 : i32
    %c0_i32_1 = arith.constant 0 : i32
    return %c0_i32, %c0_i32_0 : i32, i32
  }
  func.func @transform_2(%arg0: i32) -> (i32, i32) {
    %c0_i32 = arith.constant 0 : i32
    %c0_i32_0 = arith.constant 0 : i32
    return %arg0, %c0_i32 : i32, i32
  }
}

</mosaic_0001>

<llo_original>
// kernel: tpu_custom_call.1
$region0: #{tpu_custom_call.1}
  #allocation0 [shape = 'u32[]', space=smem, size = 0x4, offset = 0x4, fixed_abs, tag = 'smem constant byte address 0x4 - core index']
  #allocation1 [shape = 'u32[72,128]{1,0:T(1,128)}', space=vmem, size = 0x9000, scoped, tag = 'internal scratch']
  %s0 = inlined_call_operand.hbm [shape: f32[8,32], index: 0, kind: input, shape index: {}]
  %s1 = inlined_call_operand.hbm [shape: f32[8,512], index: 1, kind: input, shape index: {}]
  %s2 = inlined_call_operand.hbm [shape: f32[8,512], index: 2, kind: output, shape index: {}]
  %s3 = sld [smem:[#allocation0]]
  $region26: #{tpu_custom_call.1} parent=0
    _
  %s5 = ssub.s32 1, %s3
  %s6 = scalar_select 0, %s5, %s3
  $region1: #{tpu_custom_call.1} parent=0
    #allocation2 [shape = 'u8[4096]{0}', space=vmem, size = 0x1000, scoped, tag = 'input window, operand 0, single buffered']
    #allocation3 [shape = 's32[1]{0}', space=sflag, size = 0x4, scoped, tag = 'scoped memory for tpu_custom_call.1']
    #allocation4 [shape = 's32[1]{0}', space=sflag, size = 0x4, scoped, tag = 'scoped memory for tpu_custom_call.1']
    #allocation5 [shape = 'u8[16384]{0}', space=vmem, size = 0x4000, scoped, tag = 'input window, operand 1, single buffered']
    #allocation6 [shape = 's32[1]{0}', space=sflag, size = 0x4, scoped, tag = 'scoped memory for tpu_custom_call.1']
    #allocation7 [shape = 'u8[16384]{0}', space=vmem, size = 0x4000, scoped, tag = 'output window, operand 0, single buffered']
    %7 = vsyncpa [#allocation3], 0
    %8 = vsyncpa [#allocation6], 0
    %9 = vsyncpa [#allocation4], 0
    // Predicated region
    $region2: #{tpu_custom_call.1} parent=1 // pred_check
      _
    $region3: #{tpu_custom_call.1} parent=1 // pred_check_branch
      %11 = sbr.rel (0) target = $region5
    $region4: #{tpu_custom_call.1} parent=1 // pred_region
      %13 = vsyncadd [#allocation3], 0
      %s15 = sshll.u32 %s0, 4
      %s16 = int_to_ptr.hbm [resolvable:$true] %s15
      %s17 = sshll.u32 [#allocation2], 4
      %s18 = int_to_ptr.vmem [resolvable:$true] %s17
      %20 = dma.hbm_to_vmem [thread:$0]  %s16, 128, %s18, [#allocation3]
    $region5: #{tpu_custom_call.1} parent=1 // pred_fallthru
      _
    // Predicated region
    $region6: #{tpu_custom_call.1} parent=1 // pred_check
      _
    $region7: #{tpu_custom_call.1} parent=1 // pred_check_branch
      %22 = sbr.rel (0) target = $region9
    $region8: #{tpu_custom_call.1} parent=1 // pred_region
      %24 = vsyncadd [#allocation6], 0
      %s26 = sshll.u32 %s1, 4
      %s27 = int_to_ptr.hbm [resolvable:$true] %s26
      %s28 = sshll.u32 [#allocation5], 4
      %s29 = int_to_ptr.vmem [resolvable:$true] %s28
      %31 = dma.hbm_to_vmem [thread:$0]  %s27, 512, %s29, [#allocation6]
    $region9: #{tpu_custom_call.1} parent=1 // pred_fallthru
      _
    // Predicated region
    $region10: #{tpu_custom_call.1} parent=1 // pred_check
      _
    $region11: #{tpu_custom_call.1} parent=1 // pred_check_branch
      %33 = sbr.rel (0) target = $region13
    $region12: #{tpu_custom_call.1} parent=1 // pred_region
      %35 = dma.done [#allocation3], 128
    $region13: #{tpu_custom_call.1} parent=1 // pred_fallthru
      _
    // Predicated region
    $region14: #{tpu_custom_call.1} parent=1 // pred_check
      _
    $region15: #{tpu_custom_call.1} parent=1 // pred_check_branch
      %37 = sbr.rel (0) target = $region17
    $region16: #{tpu_custom_call.1} parent=1 // pred_region
      %39 = dma.done [#allocation6], 512
    $region17: #{tpu_custom_call.1} parent=1 // pred_fallthru
      _
    %v40 = vld [vmem:[#allocation2] sm:$0xff]
    %vm41 = vcmask 130048
    %v42 = vsel %vm41, %v40, 0.0
    %43 = vadd.xlane.f32.xlu0 %v42
    %v44 = vpop.xlane.xlu0 %43
    %46 = vrot.lane.b32.xlu0 %v40, 112
    %v47 = vpop.permute.xlu0 %46
    %v49 = vsel %vm41, %v47, 0.0
    %50 = vadd.xlane.f32.xlu0 %v49
    %v51 = vpop.xlane.xlu0 %50
    %v52 = vmul.f32 %v40, %v40
    %v53 = vsel %vm41, %v52, 0.0
    %54 = vadd.xlane.f32.xlu0 %v53
    %v55 = vpop.xlane.xlu0 %54
    %57 = vrot.lane.b32.xlu0 %v52, 112
    %v58 = vpop.permute.xlu0 %57
    %v60 = vsel %vm41, %v58, 0.0
    %61 = vadd.xlane.f32.xlu0 %v60
    %v62 = vpop.xlane.xlu0 %61
    %v63 = vmul.f32 %v40, %v47
    %v64 = vsel %vm41, %v63, 0.0
    %65 = vadd.xlane.f32.xlu0 %v64
    %v66 = vpop.xlane.xlu0 %65
    %v67 = vld [vmem:[#allocation5] sm:$0xff]
    %v68 = vld [vmem:[#allocation5 + $0x8] sm:$0xff]
    %v69 = vld [vmem:[#allocation5 + $0x10] sm:$0xff]
    %v70 = vld [vmem:[#allocation5 + $0x18] sm:$0xff]
    %v71 = vperm.slane %v67, 1
    %v72 = vperm.slane %v68, 1
    %v73 = vperm.slane %v69, 1
    %v74 = vperm.slane %v70, 1
    %v75 = vmul.f32 %v44, %v71
    %v76 = vmul.f32 %v44, %v72
    %v77 = vmul.f32 %v44, %v73
    %v78 = vmul.f32 %v44, %v74
    %v79 = vmul.f32 %v51, %v71
    %v80 = vmul.f32 %v51, %v72
    %v81 = vmul.f32 %v51, %v73
    %v82 = vmul.f32 %v51, %v74
    %v83 = vperm.slane %v67, 2
    %v84 = vperm.slane %v68, 2
    %v85 = vperm.slane %v69, 2
    %v86 = vperm.slane %v70, 2
    %v87 = vadd.f32 %v75, %v83
    %v88 = vadd.f32 %v76, %v84
    %v89 = vadd.f32 %v77, %v85
    %v90 = vadd.f32 %v78, %v86
    %v91 = vadd.f32 %v79, %v83
    %v92 = vadd.f32 %v80, %v84
    %v93 = vadd.f32 %v81, %v85
    %v94 = vadd.f32 %v82, %v86
    %v95 = vperm.slane %v67, 0
    %v96 = vperm.slane %v68, 0
    %v97 = vperm.slane %v69, 0
    %v98 = vperm.slane %v70, 0
    %v99 = vmul.f32 %v66, %v95
    %v100 = vmul.f32 %v66, %v96
    %v101 = vmul.f32 %v66, %v97
    %v102 = vmul.f32 %v66, %v98
    %v103 = vadd.f32 %v79, %v87
    %v104 = vadd.f32 %v80, %v88
    %v105 = vadd.f32 %v81, %v89
    %v106 = vadd.f32 %v82, %v90
    %v107 = vadd.f32 %v99, %v103
    %v108 = vadd.f32 %v100, %v104
    %v109 = vadd.f32 %v101, %v105
    %v110 = vadd.f32 %v102, %v106
    %v111 = vmul.f32 %v55, %v95
    %v112 = vmul.f32 %v55, %v96
    %v113 = vmul.f32 %v55, %v97
    %v114 = vmul.f32 %v55, %v98
    %v115 = vadd.f32 %v75, %v87
    %v116 = vadd.f32 %v76, %v88
    %v117 = vadd.f32 %v77, %v89
    %v118 = vadd.f32 %v78, %v90
    %v119 = vadd.f32 %v111, %v115
    %v120 = vadd.f32 %v112, %v116
    %v121 = vadd.f32 %v113, %v117
    %v122 = vadd.f32 %v114, %v118
    %v123 = vmax.f32 %v119, 1e-16
    %v124 = vmax.f32 %v120, 1e-16
    %v125 = vmax.f32 %v121, 1e-16
    %v126 = vmax.f32 %v122, 1e-16
    %v127 = vmul.f32 %v62, %v95
    %v128 = vmul.f32 %v62, %v96
    %v129 = vmul.f32 %v62, %v97
    %v130 = vmul.f32 %v62, %v98
    %v131 = vadd.f32 %v79, %v91
    %v132 = vadd.f32 %v80, %v92
    %v133 = vadd.f32 %v81, %v93
    %v134 = vadd.f32 %v82, %v94
    %v135 = vadd.f32 %v127, %v131
    %v136 = vadd.f32 %v128, %v132
    %v137 = vadd.f32 %v129, %v133
    %v138 = vadd.f32 %v130, %v134
    %v139 = vmax.f32 %v135, 1e-16
    %v140 = vmax.f32 %v136, 1e-16
    %v141 = vmax.f32 %v137, 1e-16
    %v142 = vmax.f32 %v138, 1e-16
    %v143 = vmul.f32 %v123, %v139
    %v144 = vmul.f32 %v124, %v140
    %v145 = vmul.f32 %v125, %v141
    %v146 = vmul.f32 %v126, %v142
    %v147 = vrsqrt.pop %v143
    %v148 = vmul.f32 %v147, %v143
    %v149 = vmul.f32 %v148, %v147
    %v150 = vmul.f32 0.5, %v149
    %v151 = vsub.f32 1.5, %v150
    %v152 = vmul.f32 %v147, %v151
    %vm153 = vweird.f32 %v143
    %vm154 = vweird.f32 %v147
    %vm155 = vmor %vm153, %vm154
    %v156 = vsel %vm155, %v147, %v152
    %v157 = vrsqrt.pop %v144
    %v158 = vmul.f32 %v157, %v144
    %v159 = vmul.f32 %v158, %v157
    %v160 = vmul.f32 0.5, %v159
    %v161 = vsub.f32 1.5, %v160
    %v162 = vmul.f32 %v157, %v161
    %vm163 = vweird.f32 %v144
    %vm164 = vweird.f32 %v157
    %vm165 = vmor %vm163, %vm164
    %v166 = vsel %vm165, %v157, %v162
    %v167 = vrsqrt.pop %v145
    %v168 = vmul.f32 %v167, %v145
    %v169 = vmul.f32 %v168, %v167
    %v170 = vmul.f32 0.5, %v169
    %v171 = vsub.f32 1.5, %v170
    %v172 = vmul.f32 %v167, %v171
    %vm173 = vweird.f32 %v145
    %vm174 = vweird.f32 %v167
    %vm175 = vmor %vm173, %vm174
    %v176 = vsel %vm175, %v167, %v172
    %v177 = vrsqrt.pop %v146
    %v178 = vmul.f32 %v177, %v146
    %v179 = vmul.f32 %v178, %v177
    %v180 = vmul.f32 0.5, %v179
    %v181 = vsub.f32 1.5, %v180
    %v182 = vmul.f32 %v177, %v181
    %vm183 = vweird.f32 %v146
    %vm184 = vweird.f32 %v177
    %vm185 = vmor %vm183, %vm184
    %v186 = vsel %vm185, %v177, %v182
    %v187 = vmul.f32 %v107, %v156
    %v188 = vmul.f32 %v108, %v166
    %v189 = vmul.f32 %v109, %v176
    %v190 = vmul.f32 %v110, %v186
    %191 = vst [vmem:[#allocation7] sm:$0xff] %v187
    %192 = vst [vmem:[#allocation7 + $0x8] sm:$0xff] %v188
    %193 = vst [vmem:[#allocation7 + $0x10] sm:$0xff] %v189
    %194 = vst [vmem:[#allocation7 + $0x18] sm:$0xff] %v190
    // Predicated region
    $region18: #{tpu_custom_call.1} parent=1 // pred_check
      _
    $region19: #{tpu_custom_call.1} parent=1 // pred_check_branch
      %196 = sbr.rel (0) target = $region21
    $region20: #{tpu_custom_call.1} parent=1 // pred_region
      %198 = vsyncadd [#allocation4], 0
      %s200 = sshll.u32 [#allocation7], 4
      %s201 = int_to_ptr.vmem [resolvable:$true] %s200
      %s202 = sshll.u32 %s2, 4
      %s203 = int_to_ptr.hbm [resolvable:$true] %s202
      %205 = dma.vmem_to_hbm [thread:$0]  %s201, 512, %s203, [#allocation4]
    $region21: #{tpu_custom_call.1} parent=1 // pred_fallthru
      _
    // Predicated region
    $region22: #{tpu_custom_call.1} parent=1 // pred_check
      _
    $region23: #{tpu_custom_call.1} parent=1 // pred_check_branch
      %207 = sbr.rel (0) target = $region25
    $region24: #{tpu_custom_call.1} parent=1 // pred_region
      %209 = dma.done [#allocation4], 512
    $region25: #{tpu_custom_call.1} parent=1 // pred_fallthru
      _
    %210 = vsyncpa [#allocation3], 1
    %211 = vsyncpa [#allocation6], 1
    %212 = vsyncpa [#allocation4], 1

</llo_original>
